<compile_context>
chip_gen: v5e
topology: v5e:2x2
jax: 0.10.0
libtpu: 0.0.40
codegen_flags: <defaults>
</compile_context>

<pallas_src>
import math

import jax
import jax.numpy as jnp
from jax.experimental import pallas as pl
from jax.experimental.pallas import tpu as pltpu


def _output_pointer_kernel(m1_ref, m2_ref, m3_ref, mask_ref, w_ref,
                           y1_ref, y2_ref):
    # per-grid-step views (tb batch rows):
    #   m1_ref/m2_ref/m3_ref : (tb, H, L)  native dtype (f32 here)
    #   mask_ref             : (tb, L)     f32
    #   w_ref                : (4, H, 1)   f32 rows: [w1|M1, w1|M2, w2|M1, w2|M3]
    #   y1_ref/y2_ref        : (tb, L)     f32 log-probabilities
    m1 = m1_ref[...].astype(jnp.float32)   # cast (if any) fused in-kernel: no
    m2 = m2_ref[...].astype(jnp.float32)   # extra HBM traffic, f32 accumulation
    m3 = m3_ref[...].astype(jnp.float32)

    w1a = w_ref[0]   # (H, 1) — broadcasts over batch and lanes
    w1b = w_ref[1]
    w2a = w_ref[2]
    w2b = w_ref[3]

    # 1x1 conv over concatenated channels == weighted sum over H (VPU + reduce).
    logits1 = jnp.sum(m1 * w1a + m2 * w1b, axis=1)    # (tb, L) f32
    logits2 = jnp.sum(m1 * w2a + m3 * w2b, axis=1)    # (tb, L) f32

    mask = mask_ref[...]
    neg = jnp.float32(-1e30)

    def masked_log_softmax(logits):
        x = mask * logits + (1.0 - mask) * neg        # exact PyTorch formula
        m = jnp.max(x, axis=-1, keepdims=True)
        s = x - m
        lse = jnp.log(jnp.sum(jnp.exp(s), axis=-1, keepdims=True))
        return s - lse

    y1_ref[...] = masked_log_softmax(logits1)
    y2_ref[...] = masked_log_softmax(logits2)


def output_pointer(M1, M2, M3, mask, w1, w2):
    """M1/M2/M3: (B, H, L); mask: (B, L); w1/w2: flat (2*H,) conv weights.

    Returns (Y1, Y2), each (B, L) float32 log-probabilities.
    """
    B, H, L = M1.shape
    in_bytes = jnp.dtype(M1.dtype).itemsize

    def rup(x, m):
        return ((x + m - 1) // m) * m

    Hp, Lp = rup(H, 8), rup(L, 128)        # VMEM tile-padded trailing dims

    # Generation-aware VMEM policy (v5e/v6e: 128 MiB, v7x: 64 MiB per TC).
    try:
        vmem_cap = int(pltpu.get_tpu_info().vmem_capacity_bytes)
    except Exception:
        vmem_cap = 64 << 20                # conservative (v7x-sized) fallback
    vmem_limit = int(vmem_cap * 0.9)       # explicit scoped-VMEM limit
    budget = int(vmem_cap * 0.65)          # working-set target (incl. temps)

    def vmem_est(t):
        t8 = rup(t, 8)
        m_blocks = 3 * t * Hp * Lp * in_bytes          # M1/M2/M3, one buffer
        small = 3 * t8 * Lp * 4                        # mask + 2 outputs
        w_bytes = 4 * Hp * 128 * 4                     # resident weights
        interm = 3 * t * Hp * Lp * 4                   # f32 elementwise temps
        return 2 * (m_blocks + small + w_bytes) + interm

    # tb: batch rows per grid step.  Multiple of 8 keeps the 2-D mask/output
    # blocks sublane-aligned; tb == B is the only legal sub-8 choice.
    if B <= 8:
        tb = B
    else:
        tb = 8
        # growth keeps tb <= B//2, so the grid stays >= 2 (both v7x TCs busy,
        # pipeline double-buffering effective).
        while tb * 2 <= B // 2 and vmem_est(tb * 2) <= budget:
            tb *= 2

    grid = (pl.cdiv(B, tb),)

    mask_f = mask.astype(jnp.float32)
    w1 = jnp.reshape(w1, (-1,)).astype(jnp.float32)
    w2 = jnp.reshape(w2, (-1,)).astype(jnp.float32)
    W = jnp.stack([w1[:H], w1[H:], w2[:H], w2[H:]], axis=0).reshape(4, H, 1)

    m_spec = pl.BlockSpec((tb, H, L), lambda i: (i, 0, 0))
    mask_spec = pl.BlockSpec((tb, L), lambda i: (i, 0))
    w_spec = pl.BlockSpec((4, H, 1), lambda i: (0, 0, 0))   # resident weights
    out_spec = pl.BlockSpec((tb, L), lambda i: (i, 0))

    cost = pl.CostEstimate(
        flops=8 * B * H * L + 12 * B * L,
        transcendentals=2 * B * L,
        bytes_accessed=3 * B * H * L * in_bytes + 3 * B * L * 4 + 4 * H * 4,
    )

    y1, y2 = pl.pallas_call(
        _output_pointer_kernel,
        out_shape=(jax.ShapeDtypeStruct((B, L), jnp.float32),
                   jax.ShapeDtypeStruct((B, L), jnp.float32)),
        grid_spec=pltpu.PrefetchScalarGridSpec(
            num_scalar_prefetch=0,
            grid=grid,
            in_specs=[m_spec, m_spec, m_spec, mask_spec, w_spec],
            out_specs=(out_spec, out_spec),
        ),
        compiler_params=pltpu.CompilerParams(
            dimension_semantics=("parallel",),
            vmem_limit_bytes=vmem_limit),
        cost_estimate=cost,
    )(M1, M2, M3, mask_f, W)

    return y1, y2


def xavier_uniform_conv1x1(key, in_channels):
    # nn.Conv1d(in, 1, 1) weight has shape (1, in, 1); xavier_uniform bound:
    fan_in, fan_out = in_channels, 1
    bound = math.sqrt(6.0 / (fan_in + fan_out))
    return jax.random.uniform(key, (in_channels,), jnp.float32, -bound, bound)


if __name__ == "__main__":
    B, H, L = 16, 32, 96   # batch, hidden_size, sequence length (small demo)
    key = jax.random.PRNGKey(0)
    k1, k2, k3, kw1, kw2, kl = jax.random.split(key, 6)

    M1 = jax.random.normal(k1, (B, H, L), jnp.float32)
    M2 = jax.random.normal(k2, (B, H, L), jnp.float32)
    M3 = jax.random.normal(k3, (B, H, L), jnp.float32)

    lengths = jax.random.randint(kl, (B,), 1, L + 1)
    mask = (jnp.arange(L)[None, :] < lengths[:, None]).astype(jnp.float32)  # (B, L)

    w1 = xavier_uniform_conv1x1(kw1, 2 * H)  # (2*H,)
    w2 = xavier_uniform_conv1x1(kw2, 2 * H)  # (2*H,)

    Y1, Y2 = output_pointer(M1, M2, M3, mask, w1, w2)
    jax.block_until_ready((Y1, Y2))

    # pure-JAX f32 reference (matches the PyTorch forward exactly)
    def ref(Ma, Mb, w):
        X = jnp.concatenate([Ma, Mb], axis=1)              # (B, 2H, L)
        logits = jnp.einsum('c,bcl->bl', w, X)
        masked = mask * logits + (1.0 - mask) * jnp.float32(-1e30)
        return jax.nn.log_softmax(masked, axis=-1)

    R1, R2 = ref(M1, M2, w1), ref(M1, M3, w2)
    assert bool(jnp.allclose(Y1, R1, atol=1e-4, rtol=1e-4)), "Y1 mismatch"
    assert bool(jnp.allclose(Y2, R2, atol=1e-4, rtol=1e-4)), "Y2 mismatch"

    print("KERNEL_OK")
</pallas_src>

<mosaic_0001>
module attributes {stable_mosaic.version = 11 : i64} {
  func.func @_output_pointer_kernel(%arg0: i32, %arg1: memref<8x32x96xf32, #tpu.memory_space<vmem>>, %arg2: memref<8x32x96xf32, #tpu.memory_space<vmem>>, %arg3: memref<8x32x96xf32, #tpu.memory_space<vmem>>, %arg4: memref<8x96xf32, #tpu.memory_space<vmem>>, %arg5: memref<4x32x1xf32, #tpu.memory_space<vmem>>, %arg6: memref<8x96xf32, #tpu.memory_space<vmem>>, %arg7: memref<8x96xf32, #tpu.memory_space<vmem>>) attributes {dimension_semantics = [#tpu.dimension_semantics<parallel>], iteration_bounds = array<i64: 2>, scalar_prefetch = 0 : i64, scratch_operands = 0 : i64, tpu.core_type = #tpu.core_type<tc>, window_params = [{transform_indices = @transform_0, window_bounds = array<i64: 8, 32, 96>}, {transform_indices = @transform_1, window_bounds = array<i64: 8, 32, 96>}, {transform_indices = @transform_2, window_bounds = array<i64: 8, 32, 96>}, {transform_indices = @transform_3, window_bounds = array<i64: 8, 96>}, {pipeline_mode = #tpu.pipeline_mode<synchronous>, transform_indices = @transform_4, window_bounds = array<i64: 4, 32, 1>}, {transform_indices = @transform_5, window_bounds = array<i64: 8, 96>}, {transform_indices = @transform_6, window_bounds = array<i64: 8, 96>}]} {
    %c0 = arith.constant 0 : index
    %c0_0 = arith.constant 0 : index
    %c0_1 = arith.constant 0 : index
    %0 = vector.load %arg1[%c0, %c0_0, %c0_1] : memref<8x32x96xf32, #tpu.memory_space<vmem>>, vector<8x32x96xf32>
    %c0_2 = arith.constant 0 : index
    %c0_3 = arith.constant 0 : index
    %c0_4 = arith.constant 0 : index
    %1 = vector.load %arg2[%c0_2, %c0_3, %c0_4] : memref<8x32x96xf32, #tpu.memory_space<vmem>>, vector<8x32x96xf32>
    %c0_5 = arith.constant 0 : index
    %c0_6 = arith.constant 0 : index
    %c0_7 = arith.constant 0 : index
    %2 = vector.load %arg3[%c0_5, %c0_6, %c0_7] : memref<8x32x96xf32, #tpu.memory_space<vmem>>, vector<8x32x96xf32>
    %c0_8 = arith.constant 0 : index
    %c0_9 = arith.constant 0 : index
    %c0_10 = arith.constant 0 : index
    %3 = vector.load %arg5[%c0_8, %c0_9, %c0_10] : memref<4x32x1xf32, #tpu.memory_space<vmem>>, vector<1x32x1xf32>
    %4 = vector.shape_cast %3 : vector<1x32x1xf32> to vector<32x1xf32>
    %c1 = arith.constant 1 : index
    %c0_11 = arith.constant 0 : index
    %c0_12 = arith.constant 0 : index
    %5 = vector.load %arg5[%c1, %c0_11, %c0_12] : memref<4x32x1xf32, #tpu.memory_space<vmem>>, vector<1x32x1xf32>
    %6 = vector.shape_cast %5 : vector<1x32x1xf32> to vector<32x1xf32>
    %c2 = arith.constant 2 : index
    %c0_13 = arith.constant 0 : index
    %c0_14 = arith.constant 0 : index
    %7 = vector.load %arg5[%c2, %c0_13, %c0_14] : memref<4x32x1xf32, #tpu.memory_space<vmem>>, vector<1x32x1xf32>
    %8 = vector.shape_cast %7 : vector<1x32x1xf32> to vector<32x1xf32>
    %c3 = arith.constant 3 : index
    %c0_15 = arith.constant 0 : index
    %c0_16 = arith.constant 0 : index
    %9 = vector.load %arg5[%c3, %c0_15, %c0_16] : memref<4x32x1xf32, #tpu.memory_space<vmem>>, vector<1x32x1xf32>
    %10 = vector.shape_cast %9 : vector<1x32x1xf32> to vector<32x1xf32>
    %11 = vector.shape_cast %4 : vector<32x1xf32> to vector<1x32x1xf32>
    %12 = vector.broadcast %11 : vector<1x32x1xf32> to vector<8x32x96xf32>
    %13 = arith.mulf %0, %12 : vector<8x32x96xf32>
    %14 = vector.shape_cast %6 : vector<32x1xf32> to vector<1x32x1xf32>
    %15 = vector.broadcast %14 : vector<1x32x1xf32> to vector<8x32x96xf32>
    %16 = arith.mulf %1, %15 : vector<8x32x96xf32>
    %17 = arith.addf %13, %16 : vector<8x32x96xf32>
    %cst = arith.constant dense<0.000000e+00> : vector<8x96xf32>
    %18 = vector.multi_reduction <add>, %17, %cst [1] : vector<8x32x96xf32> to vector<8x96xf32>
    %19 = vector.shape_cast %8 : vector<32x1xf32> to vector<1x32x1xf32>
    %20 = vector.broadcast %19 : vector<1x32x1xf32> to vector<8x32x96xf32>
    %21 = arith.mulf %0, %20 : vector<8x32x96xf32>
    %22 = vector.shape_cast %10 : vector<32x1xf32> to vector<1x32x1xf32>
    %23 = vector.broadcast %22 : vector<1x32x1xf32> to vector<8x32x96xf32>
    %24 = arith.mulf %2, %23 : vector<8x32x96xf32>
    %25 = arith.addf %21, %24 : vector<8x32x96xf32>
    %cst_17 = arith.constant dense<0.000000e+00> : vector<8x96xf32>
    %26 = vector.multi_reduction <add>, %25, %cst_17 [1] : vector<8x32x96xf32> to vector<8x96xf32>
    %c0_18 = arith.constant 0 : index
    %c0_19 = arith.constant 0 : index
    %27 = vector.load %arg4[%c0_18, %c0_19] : memref<8x96xf32, #tpu.memory_space<vmem>>, vector<8x96xf32>
    %28 = arith.mulf %27, %18 : vector<8x96xf32>
    %cst_20 = arith.constant 1.000000e+00 : f32
    %29 = vector.broadcast %cst_20 : f32 to vector<8x96xf32>
    %30 = arith.subf %29, %27 : vector<8x96xf32>
    %cst_21 = arith.constant -1.000000e+30 : f32
    %31 = vector.broadcast %cst_21 : f32 to vector<8x96xf32>
    %32 = arith.mulf %30, %31 : vector<8x96xf32>
    %33 = arith.addf %28, %32 : vector<8x96xf32>
    %cst_22 = arith.constant dense<0xFF800000> : vector<8xf32>
    %34 = vector.multi_reduction <maximumf>, %33, %cst_22 [1] : vector<8x96xf32> to vector<8xf32>
    %35 = vector.shape_cast %34 : vector<8xf32> to vector<8x1xf32>
    %36 = vector.broadcast %35 : vector<8x1xf32> to vector<8x96xf32>
    %37 = arith.subf %33, %36 : vector<8x96xf32>
    %38 = math.exp %37 : vector<8x96xf32>
    %cst_23 = arith.constant dense<0.000000e+00> : vector<8xf32>
    %39 = vector.multi_reduction <add>, %38, %cst_23 [1] : vector<8x96xf32> to vector<8xf32>
    %40 = vector.shape_cast %39 : vector<8xf32> to vector<8x1xf32>
    %41 = math.log %40 : vector<8x1xf32>
    %42 = vector.broadcast %41 : vector<8x1xf32> to vector<8x96xf32>
    %43 = arith.subf %37, %42 : vector<8x96xf32>
    %c0_24 = arith.constant 0 : index
    %c0_25 = arith.constant 0 : index
    %44 = vector.load %arg6[%c0_24, %c0_25] : memref<8x96xf32, #tpu.memory_space<vmem>>, vector<8x96xf32>
    tpu.vector_store %arg6[%c0_24, %c0_25], %43 {strides = array<i32>} : memref<8x96xf32, #tpu.memory_space<vmem>>, vector<8x96xf32>,
    %45 = arith.mulf %27, %26 : vector<8x96xf32>
    %cst_26 = arith.constant 1.000000e+00 : f32
    %46 = vector.broadcast %cst_26 : f32 to vector<8x96xf32>
    %47 = arith.subf %46, %27 : vector<8x96xf32>
    %cst_27 = arith.constant -1.000000e+30 : f32
    %48 = vector.broadcast %cst_27 : f32 to vector<8x96xf32>
    %49 = arith.mulf %47, %48 : vector<8x96xf32>
    %50 = arith.addf %45, %49 : vector<8x96xf32>
    %cst_28 = arith.constant dense<0xFF800000> : vector<8xf32>
    %51 = vector.multi_reduction <maximumf>, %50, %cst_28 [1] : vector<8x96xf32> to vector<8xf32>
    %52 = vector.shape_cast %51 : vector<8xf32> to vector<8x1xf32>
    %53 = vector.broadcast %52 : vector<8x1xf32> to vector<8x96xf32>
    %54 = arith.subf %50, %53 : vector<8x96xf32>
    %55 = math.exp %54 : vector<8x96xf32>
    %cst_29 = arith.constant dense<0.000000e+00> : vector<8xf32>
    %56 = vector.multi_reduction <add>, %55, %cst_29 [1] : vector<8x96xf32> to vector<8xf32>
    %57 = vector.shape_cast %56 : vector<8xf32> to vector<8x1xf32>
    %58 = math.log %57 : vector<8x1xf32>
    %59 = vector.broadcast %58 : vector<8x1xf32> to vector<8x96xf32>
    %60 = arith.subf %54, %59 : vector<8x96xf32>
    %c0_30 = arith.constant 0 : index
    %c0_31 = arith.constant 0 : index
    %61 = vector.load %arg7[%c0_30, %c0_31] : memref<8x96xf32, #tpu.memory_space<vmem>>, vector<8x96xf32>
    tpu.vector_store %arg7[%c0_30, %c0_31], %60 {strides = array<i32>} : memref<8x96xf32, #tpu.memory_space<vmem>>, vector<8x96xf32>,
    return
  }
  func.func @transform_0(%arg0: i32) -> (i32, i32, i32) {
    %c0_i32 = arith.constant 0 : i32
    %c0_i32_0 = arith.constant 0 : i32
    %c0_i32_1 = arith.constant 0 : i32
    return %arg0, %c0_i32, %c0_i32_0 : i32, i32, i32
  }
  func.func @transform_1(%arg0: i32) -> (i32, i32, i32) {
    %c0_i32 = arith.constant 0 : i32
    %c0_i32_0 = arith.constant 0 : i32
    %c0_i32_1 = arith.constant 0 : i32
    return %arg0, %c0_i32, %c0_i32_0 : i32, i32, i32
  }
  func.func @transform_2(%arg0: i32) -> (i32, i32, i32) {
    %c0_i32 = arith.constant 0 : i32
    %c0_i32_0 = arith.constant 0 : i32
    %c0_i32_1 = arith.constant 0 : i32
    return %arg0, %c0_i32, %c0_i32_0 : i32, i32, i32
  }
  func.func @transform_3(%arg0: i32) -> (i32, i32) {
    %c0_i32 = arith.constant 0 : i32
    %c0_i32_0 = arith.constant 0 : i32
    return %arg0, %c0_i32 : i32, i32
  }
  func.func @transform_4(%arg0: i32) -> (i32, i32, i32) {
    %c0_i32 = arith.constant 0 : i32
    %c0_i32_0 = arith.constant 0 : i32
    %c0_i32_1 = arith.constant 0 : i32
    %c0_i32_2 = arith.constant 0 : i32
    return %c0_i32, %c0_i32_0, %c0_i32_1 : i32, i32, i32
  }
  func.func @transform_5(%arg0: i32) -> (i32, i32) {
    %c0_i32 = arith.constant 0 : i32
    %c0_i32_0 = arith.constant 0 : i32
    return %arg0, %c0_i32 : i32, i32
  }
  func.func @transform_6(%arg0: i32) -> (i32, i32) {
    %c0_i32 = arith.constant 0 : i32
    %c0_i32_0 = arith.constant 0 : i32
    return %arg0, %c0_i32 : i32, i32
  }
}

</mosaic_0001>

<llo_original>
// kernel: tpu_custom_call.1
$region0: #{tpu_custom_call.1}
  #allocation0 [shape = 'u32[]', space=smem, size = 0x4, offset = 0x4, fixed_abs, tag = 'smem constant byte address 0x4 - core index']
  #allocation1 [shape = 'u32[72,128]{1,0:T(1,128)}', space=vmem, size = 0x9000, scoped, tag = 'internal scratch']
  %s0 = inlined_call_operand.hbm [shape: f32[16,32,96], index: 0, kind: input, shape index: {}]
  %s1 = inlined_call_operand.hbm [shape: f32[16,32,96], index: 1, kind: input, shape index: {}]
  %s2 = inlined_call_operand.hbm [shape: f32[16,32,96], index: 2, kind: input, shape index: {}]
  %s3 = inlined_call_operand.vmem [shape: f32[16,96], index: 3, kind: input, shape index: {}]
  %s4 = inlined_call_operand.vmem [shape: f32[4,32,1], index: 4, kind: input, shape index: {}]
  %s5 = inlined_call_operand.hbm [shape: f32[16,96], index: 5, kind: output, shape index: {0}]
  %s6 = inlined_call_operand.hbm [shape: f32[16,96], index: 6, kind: output, shape index: {1}]
  %7 = xla_tuple %s5, %s6
  %s8 = sld [smem:[#allocation0]]
  $region73: #{tpu_custom_call.1} parent=0
    _
  %s10 = ssub.s32 1, %s8
  %s11 = scalar_select 0, %s10, %s8
  $region1: #{tpu_custom_call.1} parent=0
    #allocation2 [shape = 'u8[262144]{0}', space=vmem, size = 0x40000, scoped, tag = 'input window, operand 0']
    #allocation3 [shape = 's32[2]{0}', space=sflag, size = 0x8, scoped, tag = 'scoped memory for tpu_custom_call.1']
    #allocation4 [shape = 's32[2]{0}', space=sflag, size = 0x8, scoped, tag = 'scoped memory for tpu_custom_call.1']
    #allocation5 [shape = 'u8[262144]{0}', space=vmem, size = 0x40000, scoped, tag = 'input window, operand 1']
    #allocation6 [shape = 's32[2]{0}', space=sflag, size = 0x8, scoped, tag = 'scoped memory for tpu_custom_call.1']
    #allocation7 [shape = 'u8[262144]{0}', space=vmem, size = 0x40000, scoped, tag = 'input window, operand 2']
    #allocation8 [shape = 'u8[8192]{0}', space=vmem, size = 0x2000, scoped, tag = 'output window, operand 0']
    #allocation9 [shape = 'u8[8192]{0}', space=vmem, size = 0x2000, scoped, tag = 'output window, operand 1']
    #allocation10 [shape = 's32[2]{0}', space=sflag, size = 0x8, scoped, tag = 'scoped memory for tpu_custom_call.1']
    %12 = vsyncpa [#allocation3], 0
    %s13 = scalar_lea.sflag [#allocation3], 1
    %14 = vsyncpa %s13, 0
    %15 = vsyncpa [#allocation6], 0
    %s16 = scalar_lea.sflag [#allocation6], 1
    %17 = vsyncpa %s16, 0
    %18 = vsyncpa [#allocation4], 0
    %s19 = scalar_lea.sflag [#allocation4], 1
    %20 = vsyncpa %s19, 0
    %21 = vsyncpa [#allocation10], 0
    %s22 = scalar_lea.sflag [#allocation10], 1
    %23 = vsyncpa %s22, 0
    loop: start=0, step=1, limit=4
    $region2: #{tpu_custom_call.1} parent=1 // loop_pre_header
      _
    $region3: #{tpu_custom_call.1} parent=1 // loop_header
      %s25 = sphi 0, %s29
      %p26 = scmp.ge.s32.totalorder %s25, 4
      %s35 = sphi 0, %s37
      %s38 = sphi 0, %s35
      %s39 = sphi 0, %s38
      %s55 = sphi 0, %s39
      %s61 = sphi 0, %s63
      %s64 = sphi 0, %s61
      %s65 = sphi 0, %s64
      %s81 = sphi 0, %s65
      %s87 = sphi 0, %s89
      %s90 = sphi 0, %s87
      %s91 = sphi 0, %s90
      %s107 = sphi 0, %s91
      %s113 = sphi 0, %s115
      %s116 = sphi 0, %s113
      %s117 = sphi 0, %s116
      %s133 = sphi 0, %s117
      %s137 = sphi 0, %s137
      %s139 = sphi 0, %s137
      %s140 = sphi 0, %s139
      %s154 = sphi 0, %s140
      %s160 = sphi 0, %s162
      %s163 = sphi 0, %s160
      %s164 = sphi 0, %s163
      %s180 = sphi 0, %s164
      %s186 = sphi 0, %s188
      %s189 = sphi 0, %s186
      %s190 = sphi 0, %s189
      %s206 = sphi 0, %s190
    $region4: #{tpu_custom_call.1} parent=1 // loop_header_branch
      %28 = sbr.rel (%p26) target = $region8
    $region5: #{tpu_custom_call.1} parent=1 // loop_body
      %s30 = ssub.s32 %s25, 1
      %s31 = ssub.s32 %s25, 2
      %s32 = sadd.s32 %s25, 1
      %s33 = ssub.s32 %s25, %s32
      %p34 = scmp.eq.s32.totalorder %s33, 0
      %s36 = sadd.s32 %s35, 1
      %s37 = scalar_select %p34, %s35, %s36
      %p40 = pneg %p34
      %p41 = scmp.eq.s32.totalorder %s25, 1
      %p42 = por %p40, %p41
      %p43 = scmp.ne.s32.totalorder %s35, %s38
      %p44 = scmp.eq.s32.totalorder %s25, 0
      %p45 = por %p43, %p44
      %p46 = scmp.ne.s32.totalorder %s35, %s38
      %p47 = scmp.eq.s32.totalorder %s30, 1
      %p48 = por %p46, %p47
      %p49 = scmp.ne.s32.totalorder %s38, %s39
      %p50 = scmp.eq.s32.totalorder %s30, 0
      %p51 = por %p49, %p50
      %p52 = scmp.ne.s32.totalorder %s38, %s39
      %p53 = scmp.eq.s32.totalorder %s31, 1
      %p54 = por %p52, %p53
      %p56 = scmp.ne.s32.totalorder %s39, %s55
      %p57 = scmp.eq.s32.totalorder %s31, 0
      %p58 = por %p56, %p57
      %s59 = ssub.s32 %s25, %s32
      %p60 = scmp.eq.s32.totalorder %s59, 0
      %s62 = sadd.s32 %s61, 1
      %s63 = scalar_select %p60, %s61, %s62
      %p66 = pneg %p60
      %p67 = scmp.eq.s32.totalorder %s25, 1
      %p68 = por %p66, %p67
      %p69 = scmp.ne.s32.totalorder %s61, %s64
      %p70 = scmp.eq.s32.totalorder %s25, 0
      %p71 = por %p69, %p70
      %p72 = scmp.ne.s32.totalorder %s61, %s64
      %p73 = scmp.eq.s32.totalorder %s30, 1
      %p74 = por %p72, %p73
      %p75 = scmp.ne.s32.totalorder %s64, %s65
      %p76 = scmp.eq.s32.totalorder %s30, 0
      %p77 = por %p75, %p76
      %p78 = scmp.ne.s32.totalorder %s64, %s65
      %p79 = scmp.eq.s32.totalorder %s31, 1
      %p80 = por %p78, %p79
      %p82 = scmp.ne.s32.totalorder %s65, %s81
      %p83 = scmp.eq.s32.totalorder %s31, 0
      %p84 = por %p82, %p83
      %s85 = ssub.s32 %s25, %s32
      %p86 = scmp.eq.s32.totalorder %s85, 0
      %s88 = sadd.s32 %s87, 1
      %s89 = scalar_select %p86, %s87, %s88
      %p92 = pneg %p86
      %p93 = scmp.eq.s32.totalorder %s25, 1
      %p94 = por %p92, %p93
      %p95 = scmp.ne.s32.totalorder %s87, %s90
      %p96 = scmp.eq.s32.totalorder %s25, 0
      %p97 = por %p95, %p96
      %p98 = scmp.ne.s32.totalorder %s87, %s90
      %p99 = scmp.eq.s32.totalorder %s30, 1
      %p100 = por %p98, %p99
      %p101 = scmp.ne.s32.totalorder %s90, %s91
      %p102 = scmp.eq.s32.totalorder %s30, 0
      %p103 = por %p101, %p102
      %p104 = scmp.ne.s32.totalorder %s90, %s91
      %p105 = scmp.eq.s32.totalorder %s31, 1
      %p106 = por %p104, %p105
      %p108 = scmp.ne.s32.totalorder %s91, %s107
      %p109 = scmp.eq.s32.totalorder %s31, 0
      %p110 = por %p108, %p109
      %s111 = ssub.s32 %s25, %s32
      %p112 = scmp.eq.s32.totalorder %s111, 0
      %s114 = sadd.s32 %s113, 1
      %s115 = scalar_select %p112, %s113, %s114
      %p118 = pneg %p112
      %p119 = scmp.eq.s32.totalorder %s25, 1
      %p120 = por %p118, %p119
      %p121 = scmp.ne.s32.totalorder %s113, %s116
      %p122 = scmp.eq.s32.totalorder %s25, 0
      %p123 = por %p121, %p122
      %p124 = scmp.ne.s32.totalorder %s113, %s116
      %p125 = scmp.eq.s32.totalorder %s30, 1
      %p126 = por %p124, %p125
      %p127 = scmp.ne.s32.totalorder %s116, %s117
      %p128 = scmp.eq.s32.totalorder %s30, 0
      %p129 = por %p127, %p128
      %p130 = scmp.ne.s32.totalorder %s116, %s117
      %p131 = scmp.eq.s32.totalorder %s31, 1
      %p132 = por %p130, %p131
      %p134 = scmp.ne.s32.totalorder %s117, %s133
      %p135 = scmp.eq.s32.totalorder %s31, 0
      %p136 = por %p134, %p135
      %s138 = sadd.s32 %s137, 1
      %p141 = scmp.eq.s32.totalorder %s25, 1
      %p142 = scmp.ne.s32.totalorder %s137, %s139
      %p143 = scmp.eq.s32.totalorder %s25, 0
      %p144 = por %p142, %p143
      %p145 = scmp.ne.s32.totalorder %s137, %s139
      %p146 = scmp.eq.s32.totalorder %s30, 1
      %p147 = por %p145, %p146
      %p148 = scmp.ne.s32.totalorder %s139, %s140
      %p149 = scmp.eq.s32.totalorder %s30, 0
      %p150 = por %p148, %p149
      %p151 = scmp.ne.s32.totalorder %s139, %s140
      %p152 = scmp.eq.s32.totalorder %s31, 1
      %p153 = por %p151, %p152
      %p155 = scmp.ne.s32.totalorder %s140, %s154
      %p156 = scmp.eq.s32.totalorder %s31, 0
      %p157 = por %p155, %p156
      %s158 = ssub.s32 %s25, %s32
      %p159 = scmp.eq.s32.totalorder %s158, 0
      %s161 = sadd.s32 %s160, 1
      %s162 = scalar_select %p159, %s160, %s161
      %p165 = pneg %p159
      %p166 = scmp.eq.s32.totalorder %s25, 1
      %p167 = por %p165, %p166
      %p168 = scmp.ne.s32.totalorder %s160, %s163
      %p169 = scmp.eq.s32.totalorder %s25, 0
      %p170 = por %p168, %p169
      %p171 = scmp.ne.s32.totalorder %s160, %s163
      %p172 = scmp.eq.s32.totalorder %s30, 1
      %p173 = por %p171, %p172
      %p174 = scmp.ne.s32.totalorder %s163, %s164
      %p175 = scmp.eq.s32.totalorder %s30, 0
      %p176 = por %p174, %p175
      %p177 = scmp.ne.s32.totalorder %s163, %s164
      %p178 = scmp.eq.s32.totalorder %s31, 1
      %p179 = por %p177, %p178
      %p181 = scmp.ne.s32.totalorder %s164, %s180
      %p182 = scmp.eq.s32.totalorder %s31, 0
      %p183 = por %p181, %p182
      %s184 = ssub.s32 %s25, %s32
      %p185 = scmp.eq.s32.totalorder %s184, 0
      %s187 = sadd.s32 %s186, 1
      %s188 = scalar_select %p185, %s186, %s187
      %p191 = pneg %p185
      %p192 = scmp.eq.s32.totalorder %s25, 1
      %p193 = por %p191, %p192
      %p194 = scmp.ne.s32.totalorder %s186, %s189
      %p195 = scmp.eq.s32.totalorder %s25, 0
      %p196 = por %p194, %p195
      %p197 = scmp.ne.s32.totalorder %s186, %s189
      %p198 = scmp.eq.s32.totalorder %s30, 1
      %p199 = por %p197, %p198
      %p200 = scmp.ne.s32.totalorder %s189, %s190
      %p201 = scmp.eq.s32.totalorder %s30, 0
      %p202 = por %p200, %p201
      %p203 = scmp.ne.s32.totalorder %s189, %s190
      %p204 = scmp.eq.s32.totalorder %s31, 1
      %p205 = por %p203, %p204
      %p207 = scmp.ne.s32.totalorder %s190, %s206
      %p208 = scmp.eq.s32.totalorder %s31, 0
      %p209 = por %p207, %p208
      %p210 = scmp.le.s32.totalorder 1, %s25
      %p211 = scmp.lt.s32.totalorder %s25, 3
      %p212 = pnand %p210, %p211
      %p213 = pneg %p212
      // Predicated region
      $region9: #{tpu_custom_call.1} parent=5 // pred_check
        _
      $region10: #{tpu_custom_call.1} parent=5 // pred_check_branch
        %215 = sbr.rel (%p212) target = $region12
      $region11: #{tpu_custom_call.1} parent=5 // pred_region
        %s216 = ssub.s32 %s25, 1
        // Predicated region
        $region13: #{tpu_custom_call.1} parent=11 // pred_check
          %p217 = pneg %p150
        $region14: #{tpu_custom_call.1} parent=11 // pred_check_branch
          %219 = sbr.rel (%p217) target = $region16
        $region15: #{tpu_custom_call.1} parent=11 // pred_region
          _
        $region16: #{tpu_custom_call.1} parent=11 // pred_fallthru
          _
      $region12: #{tpu_custom_call.1} parent=5 // pred_fallthru
        _
      %p220 = scmp.lt.s32.totalorder %s25, 2
      // Predicated region
      $region17: #{tpu_custom_call.1} parent=5 // pred_check
        %p221 = pneg %p220
      $region18: #{tpu_custom_call.1} parent=5 // pred_check_branch
        %223 = sbr.rel (%p221) target = $region20
      $region19: #{tpu_custom_call.1} parent=5 // pred_region
        // Predicated region
        $region21: #{tpu_custom_call.1} parent=19 // pred_check
          %p224 = pneg %p45
        $region22: #{tpu_custom_call.1} parent=19 // pred_check_branch
          %226 = sbr.rel (%p224) target = $region24
        $region23: #{tpu_custom_call.1} parent=19 // pred_region
          %s227 = sand.u32 %s35, 1
          %s228 = scalar_lea.sflag [#allocation3], %s227
          %s229 = sand.u32 %s35, 1
          %s230 = smul.addr %s229, 256
          %s231 = scalar_lea.vmem [#allocation2], %s230
          %s232 = smul.u32 8, %s25
          %234 = vsyncadd %s228, 0
          %s235 = smul.addr %s232, 4
          %s236 = smul.addr %s235, 8
          %s237 = scalar_lea.hbm %s0, %s236
          %s238 = sshll.u32 %s237, 4
          %s239 = int_to_ptr.hbm [resolvable:$true] %s238
          %s240 = sshll.u32 %s231, 4
          %s241 = int_to_ptr.vmem [resolvable:$true] %s240
          %246 = dma.hbm_to_vmem [thread:$0]  %s239, 4096, %s241, %s228, 128, 128, 8
        $region24: #{tpu_custom_call.1} parent=19 // pred_fallthru
          _
        // Predicated region
        $region25: #{tpu_custom_call.1} parent=19 // pred_check
          %p247 = pneg %p71
        $region26: #{tpu_custom_call.1} parent=19 // pred_check_branch
          %249 = sbr.rel (%p247) target = $region28
        $region27: #{tpu_custom_call.1} parent=19 // pred_region
          %s250 = sand.u32 %s25, 1
          %s251 = scalar_lea.sflag [#allocation6], %s250
          %s252 = sand.u32 %s61, 1
          %s253 = smul.addr %s252, 256
          %s254 = scalar_lea.vmem [#allocation5], %s253
          %s255 = smul.u32 8, %s25
          %257 = vsyncadd %s251, 0
          %s258 = smul.addr %s255, 4
          %s259 = smul.addr %s258, 8
          %s260 = scalar_lea.hbm %s1, %s259
          %s261 = sshll.u32 %s260, 4
          %s262 = int_to_ptr.hbm [resolvable:$true] %s261
          %s263 = sshll.u32 %s254, 4
          %s264 = int_to_ptr.vmem [resolvable:$true] %s263
          %269 = dma.hbm_to_vmem [thread:$0]  %s262, 4096, %s264, %s251, 128, 128, 8
        $region28: #{tpu_custom_call.1} parent=19 // pred_fallthru
          _
        // Predicated region
        $region29: #{tpu_custom_call.1} parent=19 // pred_check
          %p270 = pneg %p97
        $region30: #{tpu_custom_call.1} parent=19 // pred_check_branch
          %272 = sbr.rel (%p270) target = $region32
        $region31: #{tpu_custom_call.1} parent=19 // pred_region
          %s273 = sand.u32 %s25, 1
          %s274 = scalar_lea.sflag [#allocation6], %s273
          %s275 = sand.u32 %s87, 1
          %s276 = smul.addr %s275, 256
          %s277 = scalar_lea.vmem [#allocation7], %s276
          %s278 = smul.u32 8, %s25
          %280 = vsyncadd %s274, 0
          %s281 = smul.addr %s278, 4
          %s282 = smul.addr %s281, 8
          %s283 = scalar_lea.hbm %s2, %s282
          %s284 = sshll.u32 %s283, 4
          %s285 = int_to_ptr.hbm [resolvable:$true] %s284
          %s286 = sshll.u32 %s277, 4
          %s287 = int_to_ptr.vmem [resolvable:$true] %s286
          %292 = dma.hbm_to_vmem [thread:$0]  %s285, 4096, %s287, %s274, 128, 128, 8
        $region32: #{tpu_custom_call.1} parent=19 // pred_fallthru
          _
        // Predicated region
        $region33: #{tpu_custom_call.1} parent=19 // pred_check
          %p293 = pneg %p123
        $region34: #{tpu_custom_call.1} parent=19 // pred_check_branch
          %295 = sbr.rel (%p293) target = $region36
        $region35: #{tpu_custom_call.1} parent=19 // pred_region
          %p296 = scmp.lt.s32.totalorder %s25, 1
          %s297 = scalar_select %p296, %s25, 1
          %s298 = smul.addr %s297, 8
          %s299 = scalar_lea.vmem %s3, %s298
        $region36: #{tpu_custom_call.1} parent=19 // pred_fallthru
          _
      $region20: #{tpu_custom_call.1} parent=5 // pred_fallthru
        _
      %p300 = scmp.le.s32.totalorder 1, %s25
      %p301 = scmp.lt.s32.totalorder %s25, 3
      %p302 = pnand %p300, %p301
      %p303 = pneg %p302
      // Predicated region
      $region37: #{tpu_custom_call.1} parent=5 // pred_check
        _
      $region38: #{tpu_custom_call.1} parent=5 // pred_check_branch
        %305 = sbr.rel (%p302) target = $region40
      $region39: #{tpu_custom_call.1} parent=5 // pred_region
        %s306 = ssub.s32 %s25, 1
        %s307 = sand.u32 %s38, 1
        %s308 = scalar_lea.sflag [#allocation3], %s307
        %s309 = sand.u32 %s38, 1
        %s310 = smul.addr %s309, 256
        %s311 = scalar_lea.vmem [#allocation2], %s310
        // Predicated region
        $region41: #{tpu_custom_call.1} parent=39 // pred_check
          %p312 = pneg %p51
        $region42: #{tpu_custom_call.1} parent=39 // pred_check_branch
          %314 = sbr.rel (%p312) target = $region44
        $region43: #{tpu_custom_call.1} parent=39 // pred_region
          %316 = dma.done %s308, 4096
        $region44: #{tpu_custom_call.1} parent=39 // pred_fallthru
          _
        %s317 = sand.u32 %s30, 1
        %s318 = scalar_lea.sflag [#allocation6], %s317
        %s319 = sand.u32 %s64, 1
        %s320 = smul.addr %s319, 256
        %s321 = scalar_lea.vmem [#allocation5], %s320
        // Predicated region
        $region45: #{tpu_custom_call.1} parent=39 // pred_check
          %p322 = pneg %p77
        $region46: #{tpu_custom_call.1} parent=39 // pred_check_branch
          %324 = sbr.rel (%p322) target = $region48
        $region47: #{tpu_custom_call.1} parent=39 // pred_region
          %326 = dma.done %s318, 4096
        $region48: #{tpu_custom_call.1} parent=39 // pred_fallthru
          _
        %s327 = sand.u32 %s30, 1
        %s328 = scalar_lea.sflag [#allocation6], %s327
        %s329 = sand.u32 %s90, 1
        %s330 = smul.addr %s329, 256
        %s331 = scalar_lea.vmem [#allocation7], %s330
        // Predicated region
        $region49: #{tpu_custom_call.1} parent=39 // pred_check
          %p332 = pneg %p103
        $region50: #{tpu_custom_call.1} parent=39 // pred_check_branch
          %334 = sbr.rel (%p332) target = $region52
        $region51: #{tpu_custom_call.1} parent=39 // pred_region
          %336 = dma.done %s328, 4096
        $region52: #{tpu_custom_call.1} parent=39 // pred_fallthru
          _
        %s337 = sand.u32 %s38, 1
        %s338 = scalar_lea.sflag [#allocation3], %s337
        %s339 = sand.u32 %s38, 1
        %s340 = smul.addr %s339, 256
        %s341 = scalar_lea.vmem [#allocation2], %s340
        %p342 = pneg %p51
        %p343 = pneg %p48
        %s344 = sand.u32 %s30, 1
        %s345 = scalar_lea.sflag [#allocation6], %s344
        %s346 = sand.u32 %s64, 1
        %s347 = smul.addr %s346, 256
        %s348 = scalar_lea.vmem [#allocation5], %s347
        %p349 = pneg %p77
        %p350 = pneg %p74
        %s351 = sand.u32 %s30, 1
        %s352 = scalar_lea.sflag [#allocation6], %s351
        %s353 = sand.u32 %s90, 1
        %s354 = smul.addr %s353, 256
        %s355 = scalar_lea.vmem [#allocation7], %s354
        %p356 = pneg %p103
        %p357 = pneg %p100
        %p358 = scmp.lt.s32.totalorder %s30, 1
        %s359 = scalar_select %p358, %s30, 1
        %s360 = smul.addr %s359, 8
        %s361 = scalar_lea.vmem %s3, %s360
        %p362 = pneg %p129
        %p363 = pneg %p126
        %p364 = pneg %p150
        %p365 = pneg %p147
        %p366 = pneg %p176
        %p367 = pneg %p173
        %s368 = sand.u32 %s163, 1
        %s369 = scalar_lea.sflag [#allocation4], %s368
        %s370 = sand.u32 %s163, 1
        %s371 = smul.addr %s370, 8
        %s372 = scalar_lea.vmem [#allocation8], %s371
        %p373 = pneg %p202
        %p374 = pneg %p199
        %s375 = sand.u32 %s189, 1
        %s376 = scalar_lea.sflag [#allocation10], %s375
        %s377 = sand.u32 %s189, 1
        %s378 = smul.addr %s377, 8
        %s379 = scalar_lea.vmem [#allocation9], %s378
        %s380 = smul.u32 8, %s30
        %s381 = smul.u32 8, %s30
        %s382 = smul.u32 8, %s30
        %p383 = scmp.lt.s32.totalorder %s30, 1
        %s384 = scalar_select %p383, %s30, 1
        %s385 = smul.addr %s384, 8
        %s386 = scalar_lea.vmem %s3, %s385
        %v387 = vld [vmem:[%s311] sm:$0xff]
        %v388 = vld [vmem:[%s311 + $0x8] sm:$0xff]
        %v389 = vld [vmem:[%s311 + $0x10] sm:$0xff]
        %v390 = vld [vmem:[%s311 + $0x18] sm:$0xff]
        %v391 = vld [vmem:[%s311 + $0x20] sm:$0xff]
        %v392 = vld [vmem:[%s311 + $0x28] sm:$0xff]
        %v393 = vld [vmem:[%s311 + $0x30] sm:$0xff]
        %v394 = vld [vmem:[%s311 + $0x38] sm:$0xff]
        %v395 = vld [vmem:[%s311 + $0x40] sm:$0xff]
        %v396 = vld [vmem:[%s311 + $0x48] sm:$0xff]
        %v397 = vld [vmem:[%s311 + $0x50] sm:$0xff]
        %v398 = vld [vmem:[%s311 + $0x58] sm:$0xff]
        %v399 = vld [vmem:[%s311 + $0x60] sm:$0xff]
        %v400 = vld [vmem:[%s311 + $0x68] sm:$0xff]
        %v401 = vld [vmem:[%s311 + $0x70] sm:$0xff]
        %v402 = vld [vmem:[%s311 + $0x78] sm:$0xff]
        %v403 = vld [vmem:[%s311 + $0x80] sm:$0xff]
        %v404 = vld [vmem:[%s311 + $0x88] sm:$0xff]
        %v405 = vld [vmem:[%s311 + $0x90] sm:$0xff]
        %v406 = vld [vmem:[%s311 + $0x98] sm:$0xff]
        %v407 = vld [vmem:[%s311 + $0xa0] sm:$0xff]
        %v408 = vld [vmem:[%s311 + $0xa8] sm:$0xff]
        %v409 = vld [vmem:[%s311 + $0xb0] sm:$0xff]
        %v410 = vld [vmem:[%s311 + $0xb8] sm:$0xff]
        %v411 = vld [vmem:[%s311 + $0xc0] sm:$0xff]
        %v412 = vld [vmem:[%s311 + $0xc8] sm:$0xff]
        %v413 = vld [vmem:[%s311 + $0xd0] sm:$0xff]
        %v414 = vld [vmem:[%s311 + $0xd8] sm:$0xff]
        %v415 = vld [vmem:[%s311 + $0xe0] sm:$0xff]
        %v416 = vld [vmem:[%s311 + $0xe8] sm:$0xff]
        %v417 = vld [vmem:[%s311 + $0xf0] sm:$0xff]
        %v418 = vld [vmem:[%s311 + $0xf8] sm:$0xff]
        %v419 = vld [vmem:[%s321] sm:$0xff]
        %v420 = vld [vmem:[%s321 + $0x8] sm:$0xff]
        %v421 = vld [vmem:[%s321 + $0x10] sm:$0xff]
        %v422 = vld [vmem:[%s321 + $0x18] sm:$0xff]
        %v423 = vld [vmem:[%s321 + $0x20] sm:$0xff]
        %v424 = vld [vmem:[%s321 + $0x28] sm:$0xff]
        %v425 = vld [vmem:[%s321 + $0x30] sm:$0xff]
        %v426 = vld [vmem:[%s321 + $0x38] sm:$0xff]
        %v427 = vld [vmem:[%s321 + $0x40] sm:$0xff]
        %v428 = vld [vmem:[%s321 + $0x48] sm:$0xff]
        %v429 = vld [vmem:[%s321 + $0x50] sm:$0xff]
        %v430 = vld [vmem:[%s321 + $0x58] sm:$0xff]
        %v431 = vld [vmem:[%s321 + $0x60] sm:$0xff]
        %v432 = vld [vmem:[%s321 + $0x68] sm:$0xff]
        %v433 = vld [vmem:[%s321 + $0x70] sm:$0xff]
        %v434 = vld [vmem:[%s321 + $0x78] sm:$0xff]
        %v435 = vld [vmem:[%s321 + $0x80] sm:$0xff]
        %v436 = vld [vmem:[%s321 + $0x88] sm:$0xff]
        %v437 = vld [vmem:[%s321 + $0x90] sm:$0xff]
        %v438 = vld [vmem:[%s321 + $0x98] sm:$0xff]
        %v439 = vld [vmem:[%s321 + $0xa0] sm:$0xff]
        %v440 = vld [vmem:[%s321 + $0xa8] sm:$0xff]
        %v441 = vld [vmem:[%s321 + $0xb0] sm:$0xff]
        %v442 = vld [vmem:[%s321 + $0xb8] sm:$0xff]
        %v443 = vld [vmem:[%s321 + $0xc0] sm:$0xff]
        %v444 = vld [vmem:[%s321 + $0xc8] sm:$0xff]
        %v445 = vld [vmem:[%s321 + $0xd0] sm:$0xff]
        %v446 = vld [vmem:[%s321 + $0xd8] sm:$0xff]
        %v447 = vld [vmem:[%s321 + $0xe0] sm:$0xff]
        %v448 = vld [vmem:[%s321 + $0xe8] sm:$0xff]
        %v449 = vld [vmem:[%s321 + $0xf0] sm:$0xff]
        %v450 = vld [vmem:[%s321 + $0xf8] sm:$0xff]
        %v451 = vld [vmem:[%s331] sm:$0xff]
        %v452 = vld [vmem:[%s331 + $0x8] sm:$0xff]
        %v453 = vld [vmem:[%s331 + $0x10] sm:$0xff]
        %v454 = vld [vmem:[%s331 + $0x18] sm:$0xff]
        %v455 = vld [vmem:[%s331 + $0x20] sm:$0xff]
        %v456 = vld [vmem:[%s331 + $0x28] sm:$0xff]
        %v457 = vld [vmem:[%s331 + $0x30] sm:$0xff]
        %v458 = vld [vmem:[%s331 + $0x38] sm:$0xff]
        %v459 = vld [vmem:[%s331 + $0x40] sm:$0xff]
        %v460 = vld [vmem:[%s331 + $0x48] sm:$0xff]
        %v461 = vld [vmem:[%s331 + $0x50] sm:$0xff]
        %v462 = vld [vmem:[%s331 + $0x58] sm:$0xff]
        %v463 = vld [vmem:[%s331 + $0x60] sm:$0xff]
        %v464 = vld [vmem:[%s331 + $0x68] sm:$0xff]
        %v465 = vld [vmem:[%s331 + $0x70] sm:$0xff]
        %v466 = vld [vmem:[%s331 + $0x78] sm:$0xff]
        %v467 = vld [vmem:[%s331 + $0x80] sm:$0xff]
        %v468 = vld [vmem:[%s331 + $0x88] sm:$0xff]
        %v469 = vld [vmem:[%s331 + $0x90] sm:$0xff]
        %v470 = vld [vmem:[%s331 + $0x98] sm:$0xff]
        %v471 = vld [vmem:[%s331 + $0xa0] sm:$0xff]
        %v472 = vld [vmem:[%s331 + $0xa8] sm:$0xff]
        %v473 = vld [vmem:[%s331 + $0xb0] sm:$0xff]
        %v474 = vld [vmem:[%s331 + $0xb8] sm:$0xff]
        %v475 = vld [vmem:[%s331 + $0xc0] sm:$0xff]
        %v476 = vld [vmem:[%s331 + $0xc8] sm:$0xff]
        %v477 = vld [vmem:[%s331 + $0xd0] sm:$0xff]
        %v478 = vld [vmem:[%s331 + $0xd8] sm:$0xff]
        %v479 = vld [vmem:[%s331 + $0xe0] sm:$0xff]
        %v480 = vld [vmem:[%s331 + $0xe8] sm:$0xff]
        %v481 = vld [vmem:[%s331 + $0xf0] sm:$0xff]
        %v482 = vld [vmem:[%s331 + $0xf8] sm:$0xff]
        %v483 = vld [vmem:[%s4] sm:$0xff]
        %v484 = vld [vmem:[%s4 + $0x8] sm:$0xff]
        %v485 = vld [vmem:[%s4 + $0x10] sm:$0xff]
        %v486 = vld [vmem:[%s4 + $0x18] sm:$0xff]
        %s487 = scalar_lea.vmem %s4, 32
        %v488 = vld [vmem:[%s487] sm:$0xff]
        %v489 = vld [vmem:[%s487 + $0x8] sm:$0xff]
        %v490 = vld [vmem:[%s487 + $0x10] sm:$0xff]
        %v491 = vld [vmem:[%s487 + $0x18] sm:$0xff]
        %s492 = scalar_lea.vmem %s4, 64
        %v493 = vld [vmem:[%s492] sm:$0xff]
        %v494 = vld [vmem:[%s492 + $0x8] sm:$0xff]
        %v495 = vld [vmem:[%s492 + $0x10] sm:$0xff]
        %v496 = vld [vmem:[%s492 + $0x18] sm:$0xff]
        %s497 = scalar_lea.vmem %s4, 96
        %v498 = vld [vmem:[%s497] sm:$0xff]
        %v499 = vld [vmem:[%s497 + $0x8] sm:$0xff]
        %v500 = vld [vmem:[%s497 + $0x10] sm:$0xff]
        %v501 = vld [vmem:[%s497 + $0x18] sm:$0xff]
        %503 = vset.pattern.permute.xlu0 0
        %504 = vperm.xlu0 %503, %v483
        %v505 = vpop.permute.xlu0 %504
        %508 = vset.pattern.permute.xlu0 0
        %509 = vperm.xlu0 %508, %v484
        %v510 = vpop.permute.xlu0 %509
        %513 = vset.pattern.permute.xlu0 0
        %514 = vperm.xlu0 %513, %v485
        %v515 = vpop.permute.xlu0 %514
        %518 = vset.pattern.permute.xlu0 0
        %519 = vperm.xlu0 %518, %v486
        %v520 = vpop.permute.xlu0 %519
        %v522 = vmul.f32 %v387, %v505
        %v523 = vmul.f32 %v388, %v510
        %v524 = vmul.f32 %v389, %v515
        %v525 = vmul.f32 %v390, %v520
        %v526 = vmul.f32 %v391, %v505
        %v527 = vmul.f32 %v392, %v510
        %v528 = vmul.f32 %v393, %v515
        %v529 = vmul.f32 %v394, %v520
        %v530 = vmul.f32 %v395, %v505
        %v531 = vmul.f32 %v396, %v510
        %v532 = vmul.f32 %v397, %v515
        %v533 = vmul.f32 %v398, %v520
        %v534 = vmul.f32 %v399, %v505
        %v535 = vmul.f32 %v400, %v510
        %v536 = vmul.f32 %v401, %v515
        %v537 = vmul.f32 %v402, %v520
        %v538 = vmul.f32 %v403, %v505
        %v539 = vmul.f32 %v404, %v510
        %v540 = vmul.f32 %v405, %v515
        %v541 = vmul.f32 %v406, %v520
        %v542 = vmul.f32 %v407, %v505
        %v543 = vmul.f32 %v408, %v510
        %v544 = vmul.f32 %v409, %v515
        %v545 = vmul.f32 %v410, %v520
        %v546 = vmul.f32 %v411, %v505
        %v547 = vmul.f32 %v412, %v510
        %v548 = vmul.f32 %v413, %v515
        %v549 = vmul.f32 %v414, %v520
        %v550 = vmul.f32 %v415, %v505
        %v551 = vmul.f32 %v416, %v510
        %v552 = vmul.f32 %v417, %v515
        %v553 = vmul.f32 %v418, %v520
        %555 = vset.pattern.permute.xlu0 0
        %556 = vperm.xlu0 %555, %v488
        %v557 = vpop.permute.xlu0 %556
        %560 = vset.pattern.permute.xlu0 0
        %561 = vperm.xlu0 %560, %v489
        %v562 = vpop.permute.xlu0 %561
        %565 = vset.pattern.permute.xlu0 0
        %566 = vperm.xlu0 %565, %v490
        %v567 = vpop.permute.xlu0 %566
        %570 = vset.pattern.permute.xlu0 0
        %571 = vperm.xlu0 %570, %v491
        %v572 = vpop.permute.xlu0 %571
        %v574 = vmul.f32 %v419, %v557
        %v575 = vmul.f32 %v420, %v562
        %v576 = vmul.f32 %v421, %v567
        %v577 = vmul.f32 %v422, %v572
        %v578 = vmul.f32 %v423, %v557
        %v579 = vmul.f32 %v424, %v562
        %v580 = vmul.f32 %v425, %v567
        %v581 = vmul.f32 %v426, %v572
        %v582 = vmul.f32 %v427, %v557
        %v583 = vmul.f32 %v428, %v562
        %v584 = vmul.f32 %v429, %v567
        %v585 = vmul.f32 %v430, %v572
        %v586 = vmul.f32 %v431, %v557
        %v587 = vmul.f32 %v432, %v562
        %v588 = vmul.f32 %v433, %v567
        %v589 = vmul.f32 %v434, %v572
        %v590 = vmul.f32 %v435, %v557
        %v591 = vmul.f32 %v436, %v562
        %v592 = vmul.f32 %v437, %v567
        %v593 = vmul.f32 %v438, %v572
        %v594 = vmul.f32 %v439, %v557
        %v595 = vmul.f32 %v440, %v562
        %v596 = vmul.f32 %v441, %v567
        %v597 = vmul.f32 %v442, %v572
        %v598 = vmul.f32 %v443, %v557
        %v599 = vmul.f32 %v444, %v562
        %v600 = vmul.f32 %v445, %v567
        %v601 = vmul.f32 %v446, %v572
        %v602 = vmul.f32 %v447, %v557
        %v603 = vmul.f32 %v448, %v562
        %v604 = vmul.f32 %v449, %v567
        %v605 = vmul.f32 %v450, %v572
        %v606 = vadd.f32 %v522, %v574
        %v607 = vadd.f32 %v523, %v575
        %v608 = vadd.f32 %v524, %v576
        %v609 = vadd.f32 %v525, %v577
        %v610 = vadd.f32 %v526, %v578
        %v611 = vadd.f32 %v527, %v579
        %v612 = vadd.f32 %v528, %v580
        %v613 = vadd.f32 %v529, %v581
        %v614 = vadd.f32 %v530, %v582
        %v615 = vadd.f32 %v531, %v583
        %v616 = vadd.f32 %v532, %v584
        %v617 = vadd.f32 %v533, %v585
        %v618 = vadd.f32 %v534, %v586
        %v619 = vadd.f32 %v535, %v587
        %v620 = vadd.f32 %v536, %v588
        %v621 = vadd.f32 %v537, %v589
        %v622 = vadd.f32 %v538, %v590
        %v623 = vadd.f32 %v539, %v591
        %v624 = vadd.f32 %v540, %v592
        %v625 = vadd.f32 %v541, %v593
        %v626 = vadd.f32 %v542, %v594
        %v627 = vadd.f32 %v543, %v595
        %v628 = vadd.f32 %v544, %v596
        %v629 = vadd.f32 %v545, %v597
        %v630 = vadd.f32 %v546, %v598
        %v631 = vadd.f32 %v547, %v599
        %v632 = vadd.f32 %v548, %v600
        %v633 = vadd.f32 %v549, %v601
        %v634 = vadd.f32 %v550, %v602
        %v635 = vadd.f32 %v551, %v603
        %v636 = vadd.f32 %v552, %v604
        %v637 = vadd.f32 %v553, %v605
        %vm638 = vcmask 785408
        %v639 = vsel %vm638, %v606, 0.0
        %v640 = vsel %vm638, %v607, 0.0
        %v641 = vadd.f32 %v639, %v640
        %v642 = vsel %vm638, %v608, 0.0
        %v643 = vadd.f32 %v641, %v642
        %v644 = vsel %vm638, %v609, 0.0
        %v645 = vadd.f32 %v643, %v644
        %v646 = vrot.slane %v645, 4
        %v647 = vadd.f32 %v645, %v646
        %v648 = vrot.slane %v647, 2
        %v649 = vadd.f32 %v647, %v648
        %v650 = vrot.slane %v649, 1
        %v651 = vadd.f32 %v649, %v650
        %v652 = vsel %vm638, %v610, 0.0
        %v653 = vsel %vm638, %v611, 0.0
        %v654 = vadd.f32 %v652, %v653
        %v655 = vsel %vm638, %v612, 0.0
        %v656 = vadd.f32 %v654, %v655
        %v657 = vsel %vm638, %v613, 0.0
        %v658 = vadd.f32 %v656, %v657
        %v659 = vrot.slane %v658, 4
        %v660 = vadd.f32 %v658, %v659
        %v661 = vrot.slane %v660, 2
        %v662 = vadd.f32 %v660, %v661
        %v663 = vrot.slane %v662, 1
        %v664 = vadd.f32 %v662, %v663
        %v665 = vsel %vm638, %v614, 0.0
        %v666 = vsel %vm638, %v615, 0.0
        %v667 = vadd.f32 %v665, %v666
        %v668 = vsel %vm638, %v616, 0.0
        %v669 = vadd.f32 %v667, %v668
        %v670 = vsel %vm638, %v617, 0.0
        %v671 = vadd.f32 %v669, %v670
        %v672 = vrot.slane %v671, 4
        %v673 = vadd.f32 %v671, %v672
        %v674 = vrot.slane %v673, 2
        %v675 = vadd.f32 %v673, %v674
        %v676 = vrot.slane %v675, 1
        %v677 = vadd.f32 %v675, %v676
        %v678 = vsel %vm638, %v618, 0.0
        %v679 = vsel %vm638, %v619, 0.0
        %v680 = vadd.f32 %v678, %v679
        %v681 = vsel %vm638, %v620, 0.0
        %v682 = vadd.f32 %v680, %v681
        %v683 = vsel %vm638, %v621, 0.0
        %v684 = vadd.f32 %v682, %v683
        %v685 = vrot.slane %v684, 4
        %v686 = vadd.f32 %v684, %v685
        %v687 = vrot.slane %v686, 2
        %v688 = vadd.f32 %v686, %v687
        %v689 = vrot.slane %v688, 1
        %v690 = vadd.f32 %v688, %v689
        %v691 = vsel %vm638, %v622, 0.0
        %v692 = vsel %vm638, %v623, 0.0
        %v693 = vadd.f32 %v691, %v692
        %v694 = vsel %vm638, %v624, 0.0
        %v695 = vadd.f32 %v693, %v694
        %v696 = vsel %vm638, %v625, 0.0
        %v697 = vadd.f32 %v695, %v696
        %v698 = vrot.slane %v697, 4
        %v699 = vadd.f32 %v697, %v698
        %v700 = vrot.slane %v699, 2
        %v701 = vadd.f32 %v699, %v700
        %v702 = vrot.slane %v701, 1
        %v703 = vadd.f32 %v701, %v702
        %v704 = vsel %vm638, %v626, 0.0
        %v705 = vsel %vm638, %v627, 0.0
        %v706 = vadd.f32 %v704, %v705
        %v707 = vsel %vm638, %v628, 0.0
        %v708 = vadd.f32 %v706, %v707
        %v709 = vsel %vm638, %v629, 0.0
        %v710 = vadd.f32 %v708, %v709
        %v711 = vrot.slane %v710, 4
        %v712 = vadd.f32 %v710, %v711
        %v713 = vrot.slane %v712, 2
        %v714 = vadd.f32 %v712, %v713
        %v715 = vrot.slane %v714, 1
        %v716 = vadd.f32 %v714, %v715
        %v717 = vsel %vm638, %v630, 0.0
        %v718 = vsel %vm638, %v631, 0.0
        %v719 = vadd.f32 %v717, %v718
        %v720 = vsel %vm638, %v632, 0.0
        %v721 = vadd.f32 %v719, %v720
        %v722 = vsel %vm638, %v633, 0.0
        %v723 = vadd.f32 %v721, %v722
        %v724 = vrot.slane %v723, 4
        %v725 = vadd.f32 %v723, %v724
        %v726 = vrot.slane %v725, 2
        %v727 = vadd.f32 %v725, %v726
        %v728 = vrot.slane %v727, 1
        %v729 = vadd.f32 %v727, %v728
        %v730 = vsel %vm638, %v634, 0.0
        %v731 = vsel %vm638, %v635, 0.0
        %v732 = vadd.f32 %v730, %v731
        %v733 = vsel %vm638, %v636, 0.0
        %v734 = vadd.f32 %v732, %v733
        %v735 = vsel %vm638, %v637, 0.0
        %v736 = vadd.f32 %v734, %v735
        %v737 = vrot.slane %v736, 4
        %v738 = vadd.f32 %v736, %v737
        %v739 = vrot.slane %v738, 2
        %v740 = vadd.f32 %v738, %v739
        %v741 = vrot.slane %v740, 1
        %v742 = vadd.f32 %v740, %v741
        %744 = vset.pattern.permute.xlu0 0
        %745 = vperm.xlu0 %744, %v493
        %v746 = vpop.permute.xlu0 %745
        %749 = vset.pattern.permute.xlu0 0
        %750 = vperm.xlu0 %749, %v494
        %v751 = vpop.permute.xlu0 %750
        %754 = vset.pattern.permute.xlu0 0
        %755 = vperm.xlu0 %754, %v495
        %v756 = vpop.permute.xlu0 %755
        %759 = vset.pattern.permute.xlu0 0
        %760 = vperm.xlu0 %759, %v496
        %v761 = vpop.permute.xlu0 %760
        %v763 = vmul.f32 %v387, %v746
        %v764 = vmul.f32 %v388, %v751
        %v765 = vmul.f32 %v389, %v756
        %v766 = vmul.f32 %v390, %v761
        %v767 = vmul.f32 %v391, %v746
        %v768 = vmul.f32 %v392, %v751
        %v769 = vmul.f32 %v393, %v756
        %v770 = vmul.f32 %v394, %v761
        %v771 = vmul.f32 %v395, %v746
        %v772 = vmul.f32 %v396, %v751
        %v773 = vmul.f32 %v397, %v756
        %v774 = vmul.f32 %v398, %v761
        %v775 = vmul.f32 %v399, %v746
        %v776 = vmul.f32 %v400, %v751
        %v777 = vmul.f32 %v401, %v756
        %v778 = vmul.f32 %v402, %v761
        %v779 = vmul.f32 %v403, %v746
        %v780 = vmul.f32 %v404, %v751
        %v781 = vmul.f32 %v405, %v756
        %v782 = vmul.f32 %v406, %v761
        %v783 = vmul.f32 %v407, %v746
        %v784 = vmul.f32 %v408, %v751
        %v785 = vmul.f32 %v409, %v756
        %v786 = vmul.f32 %v410, %v761
        %v787 = vmul.f32 %v411, %v746
        %v788 = vmul.f32 %v412, %v751
        %v789 = vmul.f32 %v413, %v756
        %v790 = vmul.f32 %v414, %v761
        %v791 = vmul.f32 %v415, %v746
        %v792 = vmul.f32 %v416, %v751
        %v793 = vmul.f32 %v417, %v756
        %v794 = vmul.f32 %v418, %v761
        %796 = vset.pattern.permute.xlu0 0
        %797 = vperm.xlu0 %796, %v498
        %v798 = vpop.permute.xlu0 %797
        %801 = vset.pattern.permute.xlu0 0
        %802 = vperm.xlu0 %801, %v499
        %v803 = vpop.permute.xlu0 %802
        %806 = vset.pattern.permute.xlu0 0
        %807 = vperm.xlu0 %806, %v500
        %v808 = vpop.permute.xlu0 %807
        %811 = vset.pattern.permute.xlu0 0
        %812 = vperm.xlu0 %811, %v501
        %v813 = vpop.permute.xlu0 %812
        %v815 = vmul.f32 %v451, %v798
        %v816 = vmul.f32 %v452, %v803
        %v817 = vmul.f32 %v453, %v808
        %v818 = vmul.f32 %v454, %v813
        %v819 = vmul.f32 %v455, %v798
        %v820 = vmul.f32 %v456, %v803
        %v821 = vmul.f32 %v457, %v808
        %v822 = vmul.f32 %v458, %v813
        %v823 = vmul.f32 %v459, %v798
        %v824 = vmul.f32 %v460, %v803
        %v825 = vmul.f32 %v461, %v808
        %v826 = vmul.f32 %v462, %v813
        %v827 = vmul.f32 %v463, %v798
        %v828 = vmul.f32 %v464, %v803
        %v829 = vmul.f32 %v465, %v808
        %v830 = vmul.f32 %v466, %v813
        %v831 = vmul.f32 %v467, %v798
        %v832 = vmul.f32 %v468, %v803
        %v833 = vmul.f32 %v469, %v808
        %v834 = vmul.f32 %v470, %v813
        %v835 = vmul.f32 %v471, %v798
        %v836 = vmul.f32 %v472, %v803
        %v837 = vmul.f32 %v473, %v808
        %v838 = vmul.f32 %v474, %v813
        %v839 = vmul.f32 %v475, %v798
        %v840 = vmul.f32 %v476, %v803
        %v841 = vmul.f32 %v477, %v808
        %v842 = vmul.f32 %v478, %v813
        %v843 = vmul.f32 %v479, %v798
        %v844 = vmul.f32 %v480, %v803
        %v845 = vmul.f32 %v481, %v808
        %v846 = vmul.f32 %v482, %v813
        %v847 = vadd.f32 %v763, %v815
        %v848 = vadd.f32 %v764, %v816
        %v849 = vadd.f32 %v765, %v817
        %v850 = vadd.f32 %v766, %v818
        %v851 = vadd.f32 %v767, %v819
        %v852 = vadd.f32 %v768, %v820
        %v853 = vadd.f32 %v769, %v821
        %v854 = vadd.f32 %v770, %v822
        %v855 = vadd.f32 %v771, %v823
        %v856 = vadd.f32 %v772, %v824
        %v857 = vadd.f32 %v773, %v825
        %v858 = vadd.f32 %v774, %v826
        %v859 = vadd.f32 %v775, %v827
        %v860 = vadd.f32 %v776, %v828
        %v861 = vadd.f32 %v777, %v829
        %v862 = vadd.f32 %v778, %v830
        %v863 = vadd.f32 %v779, %v831
        %v864 = vadd.f32 %v780, %v832
        %v865 = vadd.f32 %v781, %v833
        %v866 = vadd.f32 %v782, %v834
        %v867 = vadd.f32 %v783, %v835
        %v868 = vadd.f32 %v784, %v836
        %v869 = vadd.f32 %v785, %v837
        %v870 = vadd.f32 %v786, %v838
        %v871 = vadd.f32 %v787, %v839
        %v872 = vadd.f32 %v788, %v840
        %v873 = vadd.f32 %v789, %v841
        %v874 = vadd.f32 %v790, %v842
        %v875 = vadd.f32 %v791, %v843
        %v876 = vadd.f32 %v792, %v844
        %v877 = vadd.f32 %v793, %v845
        %v878 = vadd.f32 %v794, %v846
        %v879 = vsel %vm638, %v847, 0.0
        %v880 = vsel %vm638, %v848, 0.0
        %v881 = vadd.f32 %v879, %v880
        %v882 = vsel %vm638, %v849, 0.0
        %v883 = vadd.f32 %v881, %v882
        %v884 = vsel %vm638, %v850, 0.0
        %v885 = vadd.f32 %v883, %v884
        %v886 = vrot.slane %v885, 4
        %v887 = vadd.f32 %v885, %v886
        %v888 = vrot.slane %v887, 2
        %v889 = vadd.f32 %v887, %v888
        %v890 = vrot.slane %v889, 1
        %v891 = vadd.f32 %v889, %v890
        %v892 = vsel %vm638, %v851, 0.0
        %v893 = vsel %vm638, %v852, 0.0
        %v894 = vadd.f32 %v892, %v893
        %v895 = vsel %vm638, %v853, 0.0
        %v896 = vadd.f32 %v894, %v895
        %v897 = vsel %vm638, %v854, 0.0
        %v898 = vadd.f32 %v896, %v897
        %v899 = vrot.slane %v898, 4
        %v900 = vadd.f32 %v898, %v899
        %v901 = vrot.slane %v900, 2
        %v902 = vadd.f32 %v900, %v901
        %v903 = vrot.slane %v902, 1
        %v904 = vadd.f32 %v902, %v903
        %v905 = vsel %vm638, %v855, 0.0
        %v906 = vsel %vm638, %v856, 0.0
        %v907 = vadd.f32 %v905, %v906
        %v908 = vsel %vm638, %v857, 0.0
        %v909 = vadd.f32 %v907, %v908
        %v910 = vsel %vm638, %v858, 0.0
        %v911 = vadd.f32 %v909, %v910
        %v912 = vrot.slane %v911, 4
        %v913 = vadd.f32 %v911, %v912
        %v914 = vrot.slane %v913, 2
        %v915 = vadd.f32 %v913, %v914
        %v916 = vrot.slane %v915, 1
        %v917 = vadd.f32 %v915, %v916
        %v918 = vsel %vm638, %v859, 0.0
        %v919 = vsel %vm638, %v860, 0.0
        %v920 = vadd.f32 %v918, %v919
        %v921 = vsel %vm638, %v861, 0.0
        %v922 = vadd.f32 %v920, %v921
        %v923 = vsel %vm638, %v862, 0.0
        %v924 = vadd.f32 %v922, %v923
        %v925 = vrot.slane %v924, 4
        %v926 = vadd.f32 %v924, %v925
        %v927 = vrot.slane %v926, 2
        %v928 = vadd.f32 %v926, %v927
        %v929 = vrot.slane %v928, 1
        %v930 = vadd.f32 %v928, %v929
        %v931 = vsel %vm638, %v863, 0.0
        %v932 = vsel %vm638, %v864, 0.0
        %v933 = vadd.f32 %v931, %v932
        %v934 = vsel %vm638, %v865, 0.0
        %v935 = vadd.f32 %v933, %v934
        %v936 = vsel %vm638, %v866, 0.0
        %v937 = vadd.f32 %v935, %v936
        %v938 = vrot.slane %v937, 4
        %v939 = vadd.f32 %v937, %v938
        %v940 = vrot.slane %v939, 2
        %v941 = vadd.f32 %v939, %v940
        %v942 = vrot.slane %v941, 1
        %v943 = vadd.f32 %v941, %v942
        %v944 = vsel %vm638, %v867, 0.0
        %v945 = vsel %vm638, %v868, 0.0
        %v946 = vadd.f32 %v944, %v945
        %v947 = vsel %vm638, %v869, 0.0
        %v948 = vadd.f32 %v946, %v947
        %v949 = vsel %vm638, %v870, 0.0
        %v950 = vadd.f32 %v948, %v949
        %v951 = vrot.slane %v950, 4
        %v952 = vadd.f32 %v950, %v951
        %v953 = vrot.slane %v952, 2
        %v954 = vadd.f32 %v952, %v953
        %v955 = vrot.slane %v954, 1
        %v956 = vadd.f32 %v954, %v955
        %v957 = vsel %vm638, %v871, 0.0
        %v958 = vsel %vm638, %v872, 0.0
        %v959 = vadd.f32 %v957, %v958
        %v960 = vsel %vm638, %v873, 0.0
        %v961 = vadd.f32 %v959, %v960
        %v962 = vsel %vm638, %v874, 0.0
        %v963 = vadd.f32 %v961, %v962
        %v964 = vrot.slane %v963, 4
        %v965 = vadd.f32 %v963, %v964
        %v966 = vrot.slane %v965, 2
        %v967 = vadd.f32 %v965, %v966
        %v968 = vrot.slane %v967, 1
        %v969 = vadd.f32 %v967, %v968
        %v970 = vsel %vm638, %v875, 0.0
        %v971 = vsel %vm638, %v876, 0.0
        %v972 = vadd.f32 %v970, %v971
        %v973 = vsel %vm638, %v877, 0.0
        %v974 = vadd.f32 %v972, %v973
        %v975 = vsel %vm638, %v878, 0.0
        %v976 = vadd.f32 %v974, %v975
        %v977 = vrot.slane %v976, 4
        %v978 = vadd.f32 %v976, %v977
        %v979 = vrot.slane %v978, 2
        %v980 = vadd.f32 %v978, %v979
        %v981 = vrot.slane %v980, 1
        %v982 = vadd.f32 %v980, %v981
        %v983 = vld [vmem:[%s386] sm:$0xff]
        %vm992 = vcmask 1041409
        %v993 = vsel %vm992, %v664, %v651
        %vm994 = vcmask 1042434
        %v995 = vsel %vm994, %v677, %v993
        %vm996 = vcmask 1043459
        %v997 = vsel %vm996, %v690, %v995
        %vm998 = vcmask 1044484
        %v999 = vsel %vm998, %v703, %v997
        %vm1000 = vcmask 1045509
        %v1001 = vsel %vm1000, %v716, %v999
        %vm1002 = vcmask 1046534
        %v1003 = vsel %vm1002, %v729, %v1001
        %vm1004 = vcmask 1047559
        %v1005 = vsel %vm1004, %v742, %v1003
        %v1007 = vmul.f32 %v983, %v1005
        %v1008 = vsub.f32 1.0, %v983
        %v1009 = vmul.f32 %v1008, -1e+30
        %v1010 = vadd.f32 %v1007, %v1009
        %v1011 = vsel %vm638, %v1010, -inf
        %1012 = vmax.xlane.f32.xlu0 %v1011
        %v1013 = vpop.xlane.xlu0 %1012
        %v1014 = vsub.f32 %v1010, %v1013
        %v1015 = vmul.f32 %v1014, 1.442695
        %v1016 = vpow.pop %v1015
        %v1017 = vsel %vm638, %v1016, 0.0
        %1018 = vadd.xlane.f32.xlu0 %v1017
        %v1019 = vpop.xlane.xlu0 %1018
        %v1020 = vlog2.pop %v1019
        %v1021 = vmul.f32 %v1020, 0.6931472
        %v1022 = vsub.f32 %v1014, %v1021
        %1023 = vst.msk [vmem:[%s372] sm:$0xff] %vm638, %v1022
        %v1032 = vsel %vm992, %v904, %v891
        %v1033 = vsel %vm994, %v917, %v1032
        %v1034 = vsel %vm996, %v930, %v1033
        %v1035 = vsel %vm998, %v943, %v1034
        %v1036 = vsel %vm1000, %v956, %v1035
        %v1037 = vsel %vm1002, %v969, %v1036
        %v1038 = vsel %vm1004, %v982, %v1037
        %v1040 = vmul.f32 %v983, %v1038
        %v1041 = vadd.f32 %v1040, %v1009
        %v1042 = vsel %vm638, %v1041, -inf
        %1043 = vmax.xlane.f32.xlu0 %v1042
        %v1044 = vpop.xlane.xlu0 %1043
        %v1045 = vsub.f32 %v1041, %v1044
        %v1046 = vmul.f32 %v1045, 1.442695
        %v1047 = vpow.pop %v1046
        %v1048 = vsel %vm638, %v1047, 0.0
        %1049 = vadd.xlane.f32.xlu0 %v1048
        %v1050 = vpop.xlane.xlu0 %1049
        %v1051 = vlog2.pop %v1050
        %v1052 = vmul.f32 %v1051, 0.6931472
        %v1053 = vsub.f32 %v1045, %v1052
        %1054 = vst.msk [vmem:[%s379] sm:$0xff] %vm638, %v1053
        %s1055 = sand.u32 %s163, 1
        %s1056 = scalar_lea.sflag [#allocation4], %s1055
        %s1057 = sand.u32 %s163, 1
        %s1058 = smul.addr %s1057, 8
        %s1059 = scalar_lea.vmem [#allocation8], %s1058
        %s1060 = sand.u32 %s189, 1
        %s1061 = scalar_lea.sflag [#allocation10], %s1060
        %s1062 = sand.u32 %s189, 1
        %s1063 = smul.addr %s1062, 8
        %s1064 = scalar_lea.vmem [#allocation9], %s1063
        // Predicated region
        $region53: #{tpu_custom_call.1} parent=39 // pred_check
          %p1065 = pneg %p173
        $region54: #{tpu_custom_call.1} parent=39 // pred_check_branch
          %1067 = sbr.rel (%p1065) target = $region56
        $region55: #{tpu_custom_call.1} parent=39 // pred_region
          %1069 = vsyncadd %s1056, 0
          %s1070 = smul.addr %s30, 8
          %s1071 = scalar_lea.hbm %s5, %s1070
          %s1073 = sshll.u32 %s1059, 4
          %s1074 = int_to_ptr.vmem [resolvable:$true] %s1073
          %s1075 = sshll.u32 %s1071, 4
          %s1076 = int_to_ptr.hbm [resolvable:$true] %s1075
          %1078 = dma.vmem_to_hbm [thread:$0]  %s1074, 128, %s1076, %s1056
        $region56: #{tpu_custom_call.1} parent=39 // pred_fallthru
          _
        // Predicated region
        $region57: #{tpu_custom_call.1} parent=39 // pred_check
          %p1079 = pneg %p199
        $region58: #{tpu_custom_call.1} parent=39 // pred_check_branch
          %1081 = sbr.rel (%p1079) target = $region60
        $region59: #{tpu_custom_call.1} parent=39 // pred_region
          %1083 = vsyncadd %s1061, 0
          %s1084 = smul.addr %s30, 8
          %s1085 = scalar_lea.hbm %s6, %s1084
          %s1087 = sshll.u32 %s1064, 4
          %s1088 = int_to_ptr.vmem [resolvable:$true] %s1087
          %s1089 = sshll.u32 %s1085, 4
          %s1090 = int_to_ptr.hbm [resolvable:$true] %s1089
          %1092 = dma.vmem_to_hbm [thread:$0]  %s1088, 128, %s1090, %s1061
        $region60: #{tpu_custom_call.1} parent=39 // pred_fallthru
          _
      $region40: #{tpu_custom_call.1} parent=5 // pred_fallthru
        _
      %p1093 = scmp.le.s32.totalorder 2, %s25
      // Predicated region
      $region61: #{tpu_custom_call.1} parent=5 // pred_check
        %p1094 = pneg %p1093
      $region62: #{tpu_custom_call.1} parent=5 // pred_check_branch
        %1096 = sbr.rel (%p1094) target = $region64
      $region63: #{tpu_custom_call.1} parent=5 // pred_region
        %s1097 = ssub.s32 %s25, 2
        // Predicated region
        $region65: #{tpu_custom_call.1} parent=63 // pred_check
          %p1098 = pneg %p179
        $region66: #{tpu_custom_call.1} parent=63 // pred_check_branch
          %1100 = sbr.rel (%p1098) target = $region68
        $region67: #{tpu_custom_call.1} parent=63 // pred_region
          %s1101 = sand.u32 %s164, 1
          %s1102 = scalar_lea.sflag [#allocation4], %s1101
          %s1103 = sand.u32 %s164, 1
          %s1104 = smul.addr %s1103, 8
          %s1105 = scalar_lea.vmem [#allocation8], %s1104
          %1107 = dma.done %s1102, 128
        $region68: #{tpu_custom_call.1} parent=63 // pred_fallthru
          _
        // Predicated region
        $region69: #{tpu_custom_call.1} parent=63 // pred_check
          %p1108 = pneg %p205
        $region70: #{tpu_custom_call.1} parent=63 // pred_check_branch
          %1110 = sbr.rel (%p1108) target = $region72
        $region71: #{tpu_custom_call.1} parent=63 // pred_region
          %s1111 = sand.u32 %s190, 1
          %s1112 = scalar_lea.sflag [#allocation10], %s1111
          %s1113 = sand.u32 %s190, 1
          %s1114 = smul.addr %s1113, 8
          %s1115 = scalar_lea.vmem [#allocation9], %s1114
          %1117 = dma.done %s1112, 128
        $region72: #{tpu_custom_call.1} parent=63 // pred_fallthru
          _
      $region64: #{tpu_custom_call.1} parent=5 // pred_fallthru
        _
    $region6: #{tpu_custom_call.1} parent=1 // loop_footer
      %s29 = sadd.s32 1, %s25
    $region7: #{tpu_custom_call.1} parent=1 // loop_footer_branch
      %24 = sbr.rel target = $region3
    $region8: #{tpu_custom_call.1} parent=1 // loop_exit
      _
    %1118 = vsyncpa [#allocation3], 1
    %s1119 = scalar_lea.sflag [#allocation3], 1
    %1120 = vsyncpa %s1119, 1
    %1121 = vsyncpa [#allocation6], 1
    %s1122 = scalar_lea.sflag [#allocation6], 1
    %1123 = vsyncpa %s1122, 1
    %1124 = vsyncpa [#allocation4], 1
    %s1125 = scalar_lea.sflag [#allocation4], 1
    %1126 = vsyncpa %s1125, 1
    %1127 = vsyncpa [#allocation10], 1
    %s1128 = scalar_lea.sflag [#allocation10], 1
    %1129 = vsyncpa %s1128, 1

</llo_original>
